<compile_context>
chip_gen: v7x
topology: tpu7x:2x2x1
jax: 0.10.0
libtpu: 0.0.40
codegen_flags: <defaults>
</compile_context>

<pallas_src>
import functools
import math

import jax
import jax.numpy as jnp
from jax.experimental import pallas as pl
from jax.experimental.pallas import tpu as pltpu


def _round_up(x, m):
    return (x + m - 1) // m * m


# ---------------------------------------------------------------------------
# GMM posterior (responsibilities) over the 8-d box-pair vector — plain JAX.
# This is (B,16,8)-shaped, lane-sparse work that gains nothing from Pallas.
# ---------------------------------------------------------------------------
def gmm_posterior(pairs, means, variances, weights):
    # TODO(synk): the original apply_gmm loads a pretrained GMM from the file
    # 'gmmmodel_10000randnum_3000pic.m'; we evaluate a synthetic deterministic
    # diagonal GMM's posteriors instead.
    x = pairs.astype(jnp.float32)
    diff = x[:, None, :] - means[None, :, :]                     # (B, K, d)
    quad = jnp.sum(diff * diff / variances[None, :, :], axis=-1)  # (B, K)
    log_norm = (jnp.log(weights)
                - 0.5 * jnp.sum(jnp.log(variances), axis=-1)
                - 0.5 * pairs.shape[1] * math.log(2.0 * math.pi))  # (K,)
    logp = -0.5 * quad + log_norm[None, :]
    return jax.nn.softmax(logp, axis=-1)                          # (B, K)


# ---------------------------------------------------------------------------
# Pallas kernel: out = dropout(relu(x @ W + extra))
#   extra already contains bias + spatial (GMM) contribution.
#   Accumulates directly into the VMEM-resident output tile (no scratch).
# ---------------------------------------------------------------------------
def _fc_relu_kernel(x_ref, w_ref, extra_ref, o_ref, *, apply_dropout, seed):
    k = pl.program_id(2)

    @pl.when(k == 0)
    def _():
        o_ref[...] = jnp.zeros_like(o_ref)

    o_ref[...] += jnp.dot(x_ref[...], w_ref[...],
                          preferred_element_type=jnp.float32)

    @pl.when(k == pl.num_programs(2) - 1)
    def _():
        y = o_ref[...] + extra_ref[...]
        y = jnp.maximum(y, 0.0)                       # relu=True in FC(...)
        if apply_dropout:                             # static Python flag
            # F.dropout default p=0.5; kept activations scaled by 1/(1-p)=2.
            # Seed folds both tile coordinates -> no cross-tile collisions.
            pltpu.prng_seed(seed, pl.program_id(0), pl.program_id(1))
            bits = pltpu.prng_random_bits(y.shape)
            keep = pltpu.bitcast(bits, jnp.int32) >= 0    # P(keep) = 0.5
            y = jnp.where(keep, y * 2.0, 0.0)
        o_ref[...] = y


def fc_relu_forward(x, w, extra, *, apply_dropout, seed=0,
                    tn=128, tk=1024, tm_max=256):
    """out[:M,:N] = dropout(relu(x @ w + extra)), f32 accumulation."""
    M, K = x.shape
    Kw, N = w.shape
    assert K == Kw and extra.shape == (M, N)

    # Tile sizes: tm covers the whole ROI batch (so the weight is streamed
    # from HBM exactly once), tk is large so the kernel is HBM-bound rather
    # than grid-overhead-bound.
    tm = min(_round_up(M, 8), tm_max)
    tk = min(tk, _round_up(K, 128))
    Mp = _round_up(M, tm)
    Kp = _round_up(K, tk)
    Np = _round_up(N, tn)

    x_p = jnp.pad(x.astype(jnp.float32), ((0, Mp - M), (0, Kp - K)))
    w_p = jnp.pad(w.astype(jnp.float32), ((0, Kp - K), (0, Np - N)))
    e_p = jnp.pad(extra.astype(jnp.float32), ((0, Mp - M), (0, Np - N)))

    kernel = functools.partial(_fc_relu_kernel,
                               apply_dropout=bool(apply_dropout),
                               seed=int(seed))
    out = pl.pallas_call(
        kernel,
        out_shape=jax.ShapeDtypeStruct((Mp, Np), jnp.float32),
        grid_spec=pltpu.PrefetchScalarGridSpec(
            num_scalar_prefetch=0,
            grid=(Mp // tm, Np // tn, Kp // tk),
            in_specs=[
                pl.BlockSpec((tm, tk), lambda i, j, k: (i, k)),
                pl.BlockSpec((tk, tn), lambda i, j, k: (k, j)),
                # index constant across k (innermost) -> fetched once per (i,j)
                pl.BlockSpec((tm, tn), lambda i, j, k: (i, j)),
            ],
            out_specs=pl.BlockSpec((tm, tn), lambda i, j, k: (i, j)),
        ),
        compiler_params=pltpu.CompilerParams(
            dimension_semantics=("parallel", "parallel", "arbitrary"),
            vmem_limit_bytes=32 * 1024 * 1024),
    )(x_p, w_p, e_p)
    return out[:M, :N]


# ---------------------------------------------------------------------------
# Full forward, mirroring GaussianMixtureModel.forward
# ---------------------------------------------------------------------------
def gaussian_mixture_model_forward(rois_1, rois_2, r_feature, params, *,
                                   dropout, training, seed=0):
    # pairs = cat(rois_1[:, 1:], rois_2[:, 1:], dim=1) -> (B, 8)
    pairs = jnp.concatenate([rois_1[:, 1:], rois_2[:, 1:]], axis=1)
    resp = gmm_posterior(pairs, params["gmm_means"], params["gmm_vars"],
                         params["gmm_weights"])                    # (B, K)

    feat_dim = r_feature.shape[1]
    w_feat = params["fc_w"][:feat_dim]                             # (FEAT, N)
    w_sp = params["fc_w"][feat_dim:]                               # (K, N)

    # Tiny (B,K)@(K,N) spatial contribution + bias, folded into the kernel
    # epilogue -> no HBM-materialized (B, FEAT+K) union_feature.
    extra = (jnp.dot(resp.astype(jnp.float32), w_sp,
                     precision=jax.lax.Precision.HIGHEST)
             + params["fc_b"][None, :])

    return fc_relu_forward(r_feature, w_feat, extra,
                           apply_dropout=bool(dropout and training),
                           seed=seed)


if __name__ == "__main__":
    key = jax.random.PRNGKey(0)
    B = 16           # batch (ROI pairs)
    FEAT = 2000      # stand-in for the 25088-d ROI feature (exercises padding)
    K_GMM = 16       # number of GMM components
    NHIDDEN = 64     # output dim = 2 * nhidden = 128
    D_IN = FEAT + K_GMM

    k1, k2, k3, k4, k5, k6, k7 = jax.random.split(key, 7)
    # rois: columns (batch_idx, x1, y1, x2, y2)
    xy1 = jax.random.uniform(k1, (B, 2), minval=0.0, maxval=300.0)
    wh1 = jax.random.uniform(k2, (B, 2), minval=10.0, maxval=200.0)
    rois_1 = jnp.concatenate([jnp.zeros((B, 1)), xy1, xy1 + wh1], axis=1)
    xy2 = jax.random.uniform(k3, (B, 2), minval=0.0, maxval=300.0)
    wh2 = jax.random.uniform(k4, (B, 2), minval=10.0, maxval=200.0)
    rois_2 = jnp.concatenate([jnp.zeros((B, 1)), xy2, xy2 + wh2], axis=1)
    r_feature = jax.random.normal(k5, (B, FEAT), dtype=jnp.float32)

    # Deterministic synthetic GMM parameters (stand-in for the on-disk model).
    kg1, kg2, kg3 = jax.random.split(k6, 3)
    gmm_means = jax.random.uniform(kg1, (K_GMM, 8), minval=0.0, maxval=400.0)
    gmm_vars = jax.random.uniform(kg2, (K_GMM, 8), minval=50.0, maxval=200.0) ** 2
    gmm_weights = jax.nn.softmax(jax.random.normal(kg3, (K_GMM,)))
    # weights_normal_init(self.fc_gmm, 0.01): N(0, 0.01) weight, zero bias.
    fc_w = 0.01 * jax.random.normal(k7, (D_IN, 2 * NHIDDEN), dtype=jnp.float32)
    fc_b = jnp.zeros((2 * NHIDDEN,), dtype=jnp.float32)

    params = dict(gmm_means=gmm_means, gmm_vars=gmm_vars,
                  gmm_weights=gmm_weights, fc_w=fc_w, fc_b=fc_b)

    out = gaussian_mixture_model_forward(rois_1, rois_2, r_feature, params,
                                         dropout=True, training=False)
    out = jax.block_until_ready(out)

    # Plain-JAX reference (dropout inactive since training=False).
    pairs = jnp.concatenate([rois_1[:, 1:], rois_2[:, 1:]], axis=1)
    diff = pairs[:, None, :] - gmm_means[None, :, :]
    logp = (-0.5 * jnp.sum(diff * diff / gmm_vars[None], axis=-1)
            + jnp.log(gmm_weights)[None, :]
            - 0.5 * jnp.sum(jnp.log(gmm_vars), axis=-1)[None, :]
            - 0.5 * 8 * math.log(2.0 * math.pi))
    resp = jax.nn.softmax(logp, axis=-1)
    union = jnp.concatenate([r_feature, resp], axis=1)
    ref = jnp.maximum(
        jnp.dot(union, fc_w, precision=jax.lax.Precision.HIGHEST)
        + fc_b[None, :], 0.0)

    assert out.shape == (B, 2 * NHIDDEN)
    assert jnp.allclose(out, ref, atol=1e-4, rtol=1e-4), (
        float(jnp.max(jnp.abs(out - ref))))
    print("KERNEL_OK")
</pallas_src>

<mosaic_0001>
module attributes {stable_mosaic.version = 11 : i64} {
  func.func @_fc_relu_kernel(%arg0: i32, %arg1: i32, %arg2: i32, %arg3: memref<16x1024xf32, #tpu.memory_space<vmem>>, %arg4: memref<1024x128xf32, #tpu.memory_space<vmem>>, %arg5: memref<16x128xf32, #tpu.memory_space<vmem>>, %arg6: memref<16x128xf32, #tpu.memory_space<vmem>>) attributes {dimension_semantics = [#tpu.dimension_semantics<parallel>, #tpu.dimension_semantics<parallel>, #tpu.dimension_semantics<arbitrary>], iteration_bounds = array<i64: 1, 1, 2>, scalar_prefetch = 0 : i64, scratch_operands = 0 : i64, tpu.core_type = #tpu.core_type<tc>, window_params = [{transform_indices = @transform_0, window_bounds = array<i64: 16, 1024>}, {transform_indices = @transform_1, window_bounds = array<i64: 1024, 128>}, {transform_indices = @transform_2, window_bounds = array<i64: 16, 128>}, {transform_indices = @transform_3, window_bounds = array<i64: 16, 128>}]} {
    %c0_i32 = arith.constant 0 : i32
    %0 = arith.cmpi eq, %arg2, %c0_i32 : i32
    %1 = arith.extui %0 : i1 to i32
    %c0_i32_0 = arith.constant 0 : i32
    %2 = arith.cmpi ne, %1, %c0_i32_0 : i32
    scf.if %2 {
      %cst_9 = arith.constant 0.000000e+00 : f32
      %12 = vector.broadcast %cst_9 : f32 to vector<16x128xf32>
      %c0_10 = arith.constant 0 : index
      %c0_11 = arith.constant 0 : index
      %13 = vector.load %arg6[%c0_10, %c0_11] : memref<16x128xf32, #tpu.memory_space<vmem>>, vector<16x128xf32>
      tpu.vector_store %arg6[%c0_10, %c0_11], %12 {strides = array<i32>} : memref<16x128xf32, #tpu.memory_space<vmem>>, vector<16x128xf32>,
    } else {
    }
    %c0 = arith.constant 0 : index
    %c0_1 = arith.constant 0 : index
    %3 = vector.load %arg6[%c0, %c0_1] : memref<16x128xf32, #tpu.memory_space<vmem>>, vector<16x128xf32>
    %c0_2 = arith.constant 0 : index
    %c0_3 = arith.constant 0 : index
    %4 = vector.load %arg3[%c0_2, %c0_3] : memref<16x1024xf32, #tpu.memory_space<vmem>>, vector<16x1024xf32>
    %c0_4 = arith.constant 0 : index
    %c0_5 = arith.constant 0 : index
    %5 = vector.load %arg4[%c0_4, %c0_5] : memref<1024x128xf32, #tpu.memory_space<vmem>>, vector<1024x128xf32>
    %cst = arith.constant dense<0.000000e+00> : vector<16x128xf32>
    %6 = tpu.matmul %4, %5, %cst {dimension_numbers = #tpu.dot_dimension_numbers<[1], [0], [0], [1], [0, 0, 1, 1], [], []>} : vector<16x1024xf32>, vector<1024x128xf32>, vector<16x128xf32> -> vector<16x128xf32>
    %7 = arith.addf %3, %6 : vector<16x128xf32>
    %c0_6 = arith.constant 0 : index
    %c0_7 = arith.constant 0 : index
    %8 = vector.load %arg6[%c0_6, %c0_7] : memref<16x128xf32, #tpu.memory_space<vmem>>, vector<16x128xf32>
    tpu.vector_store %arg6[%c0_6, %c0_7], %7 {strides = array<i32>} : memref<16x128xf32, #tpu.memory_space<vmem>>, vector<16x128xf32>,
    %c1_i32 = arith.constant 1 : i32
    %9 = arith.cmpi eq, %arg2, %c1_i32 : i32
    %10 = arith.extui %9 : i1 to i32
    %c0_i32_8 = arith.constant 0 : i32
    %11 = arith.cmpi ne, %10, %c0_i32_8 : i32
    scf.if %11 {
      %c0_9 = arith.constant 0 : index
      %c0_10 = arith.constant 0 : index
      %12 = vector.load %arg6[%c0_9, %c0_10] : memref<16x128xf32, #tpu.memory_space<vmem>>, vector<16x128xf32>
      %c0_11 = arith.constant 0 : index
      %c0_12 = arith.constant 0 : index
      %13 = vector.load %arg5[%c0_11, %c0_12] : memref<16x128xf32, #tpu.memory_space<vmem>>, vector<16x128xf32>
      %14 = arith.addf %12, %13 : vector<16x128xf32>
      %cst_13 = arith.constant 0.000000e+00 : f32
      %15 = vector.broadcast %cst_13 : f32 to vector<16x128xf32>
      %16 = arith.maximumf %14, %15 : vector<16x128xf32>
      %c0_14 = arith.constant 0 : index
      %c0_15 = arith.constant 0 : index
      %17 = vector.load %arg6[%c0_14, %c0_15] : memref<16x128xf32, #tpu.memory_space<vmem>>, vector<16x128xf32>
      tpu.vector_store %arg6[%c0_14, %c0_15], %16 {strides = array<i32>} : memref<16x128xf32, #tpu.memory_space<vmem>>, vector<16x128xf32>,
    } else {
    }
    return
  }
  func.func @transform_0(%arg0: i32, %arg1: i32, %arg2: i32) -> (i32, i32) {
    %c0_i32 = arith.constant 0 : i32
    return %arg0, %arg2 : i32, i32
  }
  func.func @transform_1(%arg0: i32, %arg1: i32, %arg2: i32) -> (i32, i32) {
    %c0_i32 = arith.constant 0 : i32
    return %arg2, %arg1 : i32, i32
  }
  func.func @transform_2(%arg0: i32, %arg1: i32, %arg2: i32) -> (i32, i32) {
    %c0_i32 = arith.constant 0 : i32
    return %arg0, %arg1 : i32, i32
  }
  func.func @transform_3(%arg0: i32, %arg1: i32, %arg2: i32) -> (i32, i32) {
    %c0_i32 = arith.constant 0 : i32
    return %arg0, %arg1 : i32, i32
  }
}

</mosaic_0001>

<llo_original>
// kernel: tpu_custom_call.1
$region0: #{tpu_custom_call.1}
  #allocation0 [shape = 'u32[]', space=smem, size = 0x4, offset = 0x4, fixed_abs, tag = 'smem constant byte address 0x4 - core index']
  #allocation1 [shape = 'u32[144,128]{1,0:T(1,128)}', space=vmem, size = 0x12000, scoped, tag = 'internal scratch']
  %s0 = inlined_call_operand.hbm [shape: f32[16,2048], index: 0, kind: input, shape index: {}]
  %s1 = inlined_call_operand.hbm [shape: f32[2048,128], index: 1, kind: input, shape index: {}]
  %s2 = inlined_call_operand.hbm [shape: f32[16,128], index: 2, kind: input, shape index: {}]
  %s3 = inlined_call_operand.hbm [shape: f32[16,128], index: 3, kind: output, shape index: {}]
  %s4 = sld [smem:[#allocation0]]
  $region65: #{tpu_custom_call.1} parent=0
    _
  %s6 = ssub.s32 1, %s4
  %s7 = scalar_select 0, %s6, %s4
  $region1: #{tpu_custom_call.1} parent=0
    #allocation2 [shape = 'u8[131072]{0}', space=vmem, size = 0x20000, scoped, tag = 'input window, operand 0']
    #allocation3 [shape = 's32[2]{0}', space=sflag, size = 0x8, scoped, tag = 'scoped memory for tpu_custom_call.1']
    #allocation4 [shape = 's32[2]{0}', space=sflag, size = 0x8, scoped, tag = 'scoped memory for tpu_custom_call.1']
    #allocation5 [shape = 'u8[1048576]{0}', space=vmem, size = 0x100000, scoped, tag = 'input window, operand 1']
    #allocation6 [shape = 's32[2]{0}', space=sflag, size = 0x8, scoped, tag = 'scoped memory for tpu_custom_call.1']
    #allocation7 [shape = 'u8[8192]{0}', space=vmem, size = 0x2000, scoped, tag = 'input window, operand 2, single buffered']
    #allocation8 [shape = 'u8[8192]{0}', space=vmem, size = 0x2000, scoped, tag = 'output window, operand 0, single buffered']
    %8 = vsyncpa [#allocation3], 0
    %s9 = scalar_lea.sflag [#allocation3], 1
    %10 = vsyncpa %s9, 0
    %11 = vsyncpa [#allocation6], 0
    %s12 = scalar_lea.sflag [#allocation6], 1
    %13 = vsyncpa %s12, 0
    %14 = vsyncpa [#allocation4], 0
    loop: start=0, step=1, limit=4
    $region2: #{tpu_custom_call.1} parent=1 // loop_pre_header
      _
    $region3: #{tpu_custom_call.1} parent=1 // loop_header
      %s16 = sphi 0, %s20
      %p17 = scmp.ge.s32.totalorder %s16, 4
      %s23 = sphi 0, %s42
      %s24 = sphi 0, %s38
      %s25 = sphi 0, %s34
      %s26 = sphi 0, %s23
      %s27 = sphi 0, %s24
      %s28 = sphi 0, %s25
      %s29 = sphi 0, %s26
      %s30 = sphi 0, %s27
      %s31 = sphi 0, %s28
      %s47 = sphi 0, %s49
      %s50 = sphi 0, %s47
      %s51 = sphi 0, %s50
      %s67 = sphi 0, %s51
      %s75 = sphi 0, %s77
      %s78 = sphi 0, %s75
      %s79 = sphi 0, %s78
      %s95 = sphi 0, %s79
      %s103 = sphi 0, %s105
      %s106 = sphi 0, %s103
      %s107 = sphi 0, %s106
      %s123 = sphi 0, %s107
      %s131 = sphi 0, %s133
      %s134 = sphi 0, %s131
      %s135 = sphi 0, %s134
      %s151 = sphi 0, %s135
    $region4: #{tpu_custom_call.1} parent=1 // loop_header_branch
      %19 = sbr.rel (%p17) target = $region8
    $region5: #{tpu_custom_call.1} parent=1 // loop_body
      %s21 = ssub.s32 %s16, 1
      %s22 = ssub.s32 %s16, 2
      %s32 = sadd.s32 1, %s25
      %p33 = scmp.ge.s32.totalorder %s32, 2
      %s34 = scalar_select %p33, 0, %s32
      %s35 = sadd.s32 1, %s24
      %s36 = scalar_select %p33, %s35, %s24
      %p37 = scmp.ge.s32.totalorder %s36, 1
      %s38 = scalar_select %p37, 0, %s36
      %s39 = sadd.s32 1, %s23
      %s40 = scalar_select %p37, %s39, %s23
      %p41 = scmp.ge.s32.totalorder %s40, 1
      %s42 = scalar_select %p41, 0, %s40
      %s43 = ssub.s32 %s23, %s42
      %s44 = ssub.s32 %s25, %s34
      %s45 = sor.u32 %s43, %s44
      %p46 = scmp.eq.s32.totalorder %s45, 0
      %s48 = sadd.s32 %s47, 1
      %s49 = scalar_select %p46, %s47, %s48
      %p52 = pneg %p46
      %p53 = scmp.eq.s32.totalorder %s16, 1
      %p54 = por %p52, %p53
      %p55 = scmp.ne.s32.totalorder %s47, %s50
      %p56 = scmp.eq.s32.totalorder %s16, 0
      %p57 = por %p55, %p56
      %p58 = scmp.ne.s32.totalorder %s47, %s50
      %p59 = scmp.eq.s32.totalorder %s21, 1
      %p60 = por %p58, %p59
      %p61 = scmp.ne.s32.totalorder %s50, %s51
      %p62 = scmp.eq.s32.totalorder %s21, 0
      %p63 = por %p61, %p62
      %p64 = scmp.ne.s32.totalorder %s50, %s51
      %p65 = scmp.eq.s32.totalorder %s22, 1
      %p66 = por %p64, %p65
      %p68 = scmp.ne.s32.totalorder %s51, %s67
      %p69 = scmp.eq.s32.totalorder %s22, 0
      %p70 = por %p68, %p69
      %s71 = ssub.s32 %s25, %s34
      %s72 = ssub.s32 %s24, %s38
      %s73 = sor.u32 %s71, %s72
      %p74 = scmp.eq.s32.totalorder %s73, 0
      %s76 = sadd.s32 %s75, 1
      %s77 = scalar_select %p74, %s75, %s76
      %p80 = pneg %p74
      %p81 = scmp.eq.s32.totalorder %s16, 1
      %p82 = por %p80, %p81
      %p83 = scmp.ne.s32.totalorder %s75, %s78
      %p84 = scmp.eq.s32.totalorder %s16, 0
      %p85 = por %p83, %p84
      %p86 = scmp.ne.s32.totalorder %s75, %s78
      %p87 = scmp.eq.s32.totalorder %s21, 1
      %p88 = por %p86, %p87
      %p89 = scmp.ne.s32.totalorder %s78, %s79
      %p90 = scmp.eq.s32.totalorder %s21, 0
      %p91 = por %p89, %p90
      %p92 = scmp.ne.s32.totalorder %s78, %s79
      %p93 = scmp.eq.s32.totalorder %s22, 1
      %p94 = por %p92, %p93
      %p96 = scmp.ne.s32.totalorder %s79, %s95
      %p97 = scmp.eq.s32.totalorder %s22, 0
      %p98 = por %p96, %p97
      %s99 = ssub.s32 %s23, %s42
      %s100 = ssub.s32 %s24, %s38
      %s101 = sor.u32 %s99, %s100
      %p102 = scmp.eq.s32.totalorder %s101, 0
      %s104 = sadd.s32 %s103, 1
      %s105 = scalar_select %p102, %s103, %s104
      %p108 = pneg %p102
      %p109 = scmp.eq.s32.totalorder %s16, 1
      %p110 = por %p108, %p109
      %p111 = scmp.ne.s32.totalorder %s103, %s106
      %p112 = scmp.eq.s32.totalorder %s16, 0
      %p113 = por %p111, %p112
      %p114 = scmp.ne.s32.totalorder %s103, %s106
      %p115 = scmp.eq.s32.totalorder %s21, 1
      %p116 = por %p114, %p115
      %p117 = scmp.ne.s32.totalorder %s106, %s107
      %p118 = scmp.eq.s32.totalorder %s21, 0
      %p119 = por %p117, %p118
      %p120 = scmp.ne.s32.totalorder %s106, %s107
      %p121 = scmp.eq.s32.totalorder %s22, 1
      %p122 = por %p120, %p121
      %p124 = scmp.ne.s32.totalorder %s107, %s123
      %p125 = scmp.eq.s32.totalorder %s22, 0
      %p126 = por %p124, %p125
      %s127 = ssub.s32 %s23, %s42
      %s128 = ssub.s32 %s24, %s38
      %s129 = sor.u32 %s127, %s128
      %p130 = scmp.eq.s32.totalorder %s129, 0
      %s132 = sadd.s32 %s131, 1
      %s133 = scalar_select %p130, %s131, %s132
      %p136 = pneg %p130
      %p137 = scmp.eq.s32.totalorder %s16, 1
      %p138 = por %p136, %p137
      %p139 = scmp.ne.s32.totalorder %s131, %s134
      %p140 = scmp.eq.s32.totalorder %s16, 0
      %p141 = por %p139, %p140
      %p142 = scmp.ne.s32.totalorder %s131, %s134
      %p143 = scmp.eq.s32.totalorder %s21, 1
      %p144 = por %p142, %p143
      %p145 = scmp.ne.s32.totalorder %s134, %s135
      %p146 = scmp.eq.s32.totalorder %s21, 0
      %p147 = por %p145, %p146
      %p148 = scmp.ne.s32.totalorder %s134, %s135
      %p149 = scmp.eq.s32.totalorder %s22, 1
      %p150 = por %p148, %p149
      %p152 = scmp.ne.s32.totalorder %s135, %s151
      %p153 = scmp.eq.s32.totalorder %s22, 0
      %p154 = por %p152, %p153
      %p155 = scmp.le.s32.totalorder 1, %s16
      %p156 = scmp.lt.s32.totalorder %s16, 3
      %p157 = pnand %p155, %p156
      %p158 = pneg %p157
      // Predicated region
      $region9: #{tpu_custom_call.1} parent=5 // pred_check
        _
      $region10: #{tpu_custom_call.1} parent=5 // pred_check_branch
        %160 = sbr.rel (%p157) target = $region12
      $region11: #{tpu_custom_call.1} parent=5 // pred_region
        %s161 = ssub.s32 %s16, 1
        // Predicated region
        $region13: #{tpu_custom_call.1} parent=11 // pred_check
          %p162 = pneg %p119
        $region14: #{tpu_custom_call.1} parent=11 // pred_check_branch
          %164 = sbr.rel (%p162) target = $region16
        $region15: #{tpu_custom_call.1} parent=11 // pred_region
          %s165 = smul.u32 2, %s26
          %s167 = ssub.s32 256, 256
          %168 = vsyncadd [#allocation6], %s167
          %s169 = sadd.s32 %s27, %s165
          %s170 = smul.addr %s169, 128
          %s171 = scalar_lea.hbm %s2, %s170
          %s172 = sshll.u32 [#allocation7], 4
          %s173 = int_to_ptr.vmem [resolvable:$true] %s172
          %178 = dma.hbm_to_vmem [thread:$0]  %s171, 256, %s173, [#allocation6], 128, 128, 8
        $region16: #{tpu_custom_call.1} parent=11 // pred_fallthru
          _
      $region12: #{tpu_custom_call.1} parent=5 // pred_fallthru
        _
      %p179 = scmp.lt.s32.totalorder %s16, 2
      // Predicated region
      $region17: #{tpu_custom_call.1} parent=5 // pred_check
        %p180 = pneg %p179
      $region18: #{tpu_custom_call.1} parent=5 // pred_check_branch
        %182 = sbr.rel (%p180) target = $region20
      $region19: #{tpu_custom_call.1} parent=5 // pred_region
        // Predicated region
        $region21: #{tpu_custom_call.1} parent=19 // pred_check
          %p183 = pneg %p57
        $region22: #{tpu_custom_call.1} parent=19 // pred_check_branch
          %185 = sbr.rel (%p183) target = $region24
        $region23: #{tpu_custom_call.1} parent=19 // pred_region
          %s186 = sand.u32 %s47, 1
          %s187 = scalar_lea.sflag [#allocation3], %s186
          %s188 = sand.u32 %s47, 1
          %s189 = smul.addr %s188, 128
          %s190 = scalar_lea.vmem [#allocation2], %s189
          %s191 = smul.u32 2, %s23
          %s192 = smul.u32 8, %s25
          %s194 = ssub.s32 2048, 2048
          %195 = vsyncadd %s187, %s194
          %s196 = smul.addr %s191, 16
          %s197 = sadd.s32 %s192, %s196
          %s198 = smul.addr %s197, 128
          %s199 = scalar_lea.hbm %s0, %s198
          %s200 = sshll.u32 %s190, 4
          %s201 = int_to_ptr.vmem [resolvable:$true] %s200
          %206 = dma.hbm_to_vmem [thread:$0]  %s199, 2048, %s201, %s187, 2048, 1024, 64
        $region24: #{tpu_custom_call.1} parent=19 // pred_fallthru
          _
        // Predicated region
        $region25: #{tpu_custom_call.1} parent=19 // pred_check
          %p207 = pneg %p85
        $region26: #{tpu_custom_call.1} parent=19 // pred_check_branch
          %209 = sbr.rel (%p207) target = $region28
        $region27: #{tpu_custom_call.1} parent=19 // pred_region
          %s210 = sand.u32 %s16, 1
          %s211 = scalar_lea.sflag [#allocation6], %s210
          %s212 = sand.u32 %s75, 1
          %s213 = smul.addr %s212, 1024
          %s214 = scalar_lea.vmem [#allocation5], %s213
          %s215 = smul.u32 128, %s25
          %s217 = ssub.s32 16384, 16384
          %218 = vsyncadd %s211, %s217
          %s219 = sadd.s32 %s24, %s215
          %s220 = smul.addr %s219, 128
          %s221 = scalar_lea.hbm %s1, %s220
          %s222 = sshll.u32 %s214, 4
          %s223 = int_to_ptr.vmem [resolvable:$true] %s222
          %228 = dma.hbm_to_vmem [thread:$0]  %s221, 16384, %s223, %s211, 128, 128, 8
        $region28: #{tpu_custom_call.1} parent=19 // pred_fallthru
          _
      $region20: #{tpu_custom_call.1} parent=5 // pred_fallthru
        _
      %p229 = scmp.le.s32.totalorder 1, %s16
      %p230 = scmp.lt.s32.totalorder %s16, 3
      %p231 = pnand %p229, %p230
      %p232 = pneg %p231
      // Predicated region
      $region29: #{tpu_custom_call.1} parent=5 // pred_check
        _
      $region30: #{tpu_custom_call.1} parent=5 // pred_check_branch
        %234 = sbr.rel (%p231) target = $region32
      $region31: #{tpu_custom_call.1} parent=5 // pred_region
        %s235 = ssub.s32 %s16, 1
        %s236 = sand.u32 %s50, 1
        %s237 = scalar_lea.sflag [#allocation3], %s236
        %s238 = sand.u32 %s50, 1
        %s239 = smul.addr %s238, 128
        %s240 = scalar_lea.vmem [#allocation2], %s239
        // Predicated region
        $region33: #{tpu_custom_call.1} parent=31 // pred_check
          %p241 = pneg %p63
        $region34: #{tpu_custom_call.1} parent=31 // pred_check_branch
          %243 = sbr.rel (%p241) target = $region36
        $region35: #{tpu_custom_call.1} parent=31 // pred_region
          %244 = dma.done %s237, 2048
        $region36: #{tpu_custom_call.1} parent=31 // pred_fallthru
          _
        %s245 = sand.u32 %s21, 1
        %s246 = scalar_lea.sflag [#allocation6], %s245
        %s247 = sand.u32 %s78, 1
        %s248 = smul.addr %s247, 1024
        %s249 = scalar_lea.vmem [#allocation5], %s248
        // Predicated region
        $region37: #{tpu_custom_call.1} parent=31 // pred_check
          %p250 = pneg %p91
        $region38: #{tpu_custom_call.1} parent=31 // pred_check_branch
          %252 = sbr.rel (%p250) target = $region40
        $region39: #{tpu_custom_call.1} parent=31 // pred_region
          %253 = dma.done %s246, 16384
        $region40: #{tpu_custom_call.1} parent=31 // pred_fallthru
          _
        // Predicated region
        $region41: #{tpu_custom_call.1} parent=31 // pred_check
          %p254 = pneg %p119
        $region42: #{tpu_custom_call.1} parent=31 // pred_check_branch
          %256 = sbr.rel (%p254) target = $region44
        $region43: #{tpu_custom_call.1} parent=31 // pred_region
          %257 = dma.done [#allocation6], 256
        $region44: #{tpu_custom_call.1} parent=31 // pred_fallthru
          _
        %s258 = sand.u32 %s50, 1
        %s259 = scalar_lea.sflag [#allocation3], %s258
        %s260 = sand.u32 %s50, 1
        %s261 = smul.addr %s260, 128
        %s262 = scalar_lea.vmem [#allocation2], %s261
        %p263 = pneg %p63
        %p264 = pneg %p60
        %s265 = sand.u32 %s21, 1
        %s266 = scalar_lea.sflag [#allocation6], %s265
        %s267 = sand.u32 %s78, 1
        %s268 = smul.addr %s267, 1024
        %s269 = scalar_lea.vmem [#allocation5], %s268
        %p270 = pneg %p91
        %p271 = pneg %p88
        %p272 = pneg %p119
        %p273 = pneg %p116
        %p274 = pneg %p147
        %p275 = pneg %p144
        %s276 = smul.u32 2, %s26
        %s277 = smul.u32 8, %s28
        %s278 = smul.u32 128, %s28
        %s279 = smul.u32 2, %s26
        %s280 = smul.u32 2, %s26
        %p281 = scmp.eq.s32.totalorder %s28, 0
        // Predicated region
        $region45: #{tpu_custom_call.1} parent=31 // pred_check
          %p282 = pneg %p281
        $region46: #{tpu_custom_call.1} parent=31 // pred_check_branch
          %284 = sbr.rel (%p282) target = $region48
        $region47: #{tpu_custom_call.1} parent=31 // pred_region
          %285 = vst [vmem:[#allocation8] sm:$0xff] 0.0
          %286 = vst [vmem:[#allocation8 + $0x8] sm:$0xff] 0.0
        $region48: #{tpu_custom_call.1} parent=31 // pred_fallthru
          _
        %v287 = vld [vmem:[#allocation8] sm:$0xff]
        %v288 = vld [vmem:[#allocation8 + $0x8] sm:$0xff]
        %v289 = vld [vmem:[%s240] sm:$0xff]
        %v290 = vld [vmem:[%s240 + $0x8] sm:$0xff]
        %v291 = vld [vmem:[%s240 + $0x10] sm:$0xff]
        %v292 = vld [vmem:[%s240 + $0x18] sm:$0xff]
        %v293 = vld [vmem:[%s240 + $0x20] sm:$0xff]
        %v294 = vld [vmem:[%s240 + $0x28] sm:$0xff]
        %v295 = vld [vmem:[%s240 + $0x30] sm:$0xff]
        %v296 = vld [vmem:[%s240 + $0x38] sm:$0xff]
        %v297 = vld [vmem:[%s240 + $0x40] sm:$0xff]
        %v298 = vld [vmem:[%s240 + $0x48] sm:$0xff]
        %v299 = vld [vmem:[%s240 + $0x50] sm:$0xff]
        %v300 = vld [vmem:[%s240 + $0x58] sm:$0xff]
        %v301 = vld [vmem:[%s240 + $0x60] sm:$0xff]
        %v302 = vld [vmem:[%s240 + $0x68] sm:$0xff]
        %v303 = vld [vmem:[%s240 + $0x70] sm:$0xff]
        %v304 = vld [vmem:[%s240 + $0x78] sm:$0xff]
        %v305 = vld [vmem:[%s249] sm:$0xff]
        %v306 = vld [vmem:[%s249 + $0x8] sm:$0xff]
        %v307 = vld [vmem:[%s249 + $0x10] sm:$0xff]
        %v308 = vld [vmem:[%s249 + $0x18] sm:$0xff]
        %v309 = vld [vmem:[%s249 + $0x20] sm:$0xff]
        %v310 = vld [vmem:[%s249 + $0x28] sm:$0xff]
        %v311 = vld [vmem:[%s249 + $0x30] sm:$0xff]
        %v312 = vld [vmem:[%s249 + $0x38] sm:$0xff]
        %v313 = vld [vmem:[%s249 + $0x40] sm:$0xff]
        %v314 = vld [vmem:[%s249 + $0x48] sm:$0xff]
        %v315 = vld [vmem:[%s249 + $0x50] sm:$0xff]
        %v316 = vld [vmem:[%s249 + $0x58] sm:$0xff]
        %v317 = vld [vmem:[%s249 + $0x60] sm:$0xff]
        %v318 = vld [vmem:[%s249 + $0x68] sm:$0xff]
        %v319 = vld [vmem:[%s249 + $0x70] sm:$0xff]
        %v320 = vld [vmem:[%s249 + $0x78] sm:$0xff]
        %v321 = vld [vmem:[%s249 + $0x80] sm:$0xff]
        %v322 = vld [vmem:[%s249 + $0x88] sm:$0xff]
        %v323 = vld [vmem:[%s249 + $0x90] sm:$0xff]
        %v324 = vld [vmem:[%s249 + $0x98] sm:$0xff]
        %v325 = vld [vmem:[%s249 + $0xa0] sm:$0xff]
        %v326 = vld [vmem:[%s249 + $0xa8] sm:$0xff]
        %v327 = vld [vmem:[%s249 + $0xb0] sm:$0xff]
        %v328 = vld [vmem:[%s249 + $0xb8] sm:$0xff]
        %v329 = vld [vmem:[%s249 + $0xc0] sm:$0xff]
        %v330 = vld [vmem:[%s249 + $0xc8] sm:$0xff]
        %v331 = vld [vmem:[%s249 + $0xd0] sm:$0xff]
        %v332 = vld [vmem:[%s249 + $0xd8] sm:$0xff]
        %v333 = vld [vmem:[%s249 + $0xe0] sm:$0xff]
        %v334 = vld [vmem:[%s249 + $0xe8] sm:$0xff]
        %v335 = vld [vmem:[%s249 + $0xf0] sm:$0xff]
        %v336 = vld [vmem:[%s249 + $0xf8] sm:$0xff]
        %v337 = vld [vmem:[%s249 + $0x100] sm:$0xff]
        %v338 = vld [vmem:[%s249 + $0x108] sm:$0xff]
        %v339 = vld [vmem:[%s249 + $0x110] sm:$0xff]
        %v340 = vld [vmem:[%s249 + $0x118] sm:$0xff]
        %v341 = vld [vmem:[%s249 + $0x120] sm:$0xff]
        %v342 = vld [vmem:[%s249 + $0x128] sm:$0xff]
        %v343 = vld [vmem:[%s249 + $0x130] sm:$0xff]
        %v344 = vld [vmem:[%s249 + $0x138] sm:$0xff]
        %v345 = vld [vmem:[%s249 + $0x140] sm:$0xff]
        %v346 = vld [vmem:[%s249 + $0x148] sm:$0xff]
        %v347 = vld [vmem:[%s249 + $0x150] sm:$0xff]
        %v348 = vld [vmem:[%s249 + $0x158] sm:$0xff]
        %v349 = vld [vmem:[%s249 + $0x160] sm:$0xff]
        %v350 = vld [vmem:[%s249 + $0x168] sm:$0xff]
        %v351 = vld [vmem:[%s249 + $0x170] sm:$0xff]
        %v352 = vld [vmem:[%s249 + $0x178] sm:$0xff]
        %v353 = vld [vmem:[%s249 + $0x180] sm:$0xff]
        %v354 = vld [vmem:[%s249 + $0x188] sm:$0xff]
        %v355 = vld [vmem:[%s249 + $0x190] sm:$0xff]
        %v356 = vld [vmem:[%s249 + $0x198] sm:$0xff]
        %v357 = vld [vmem:[%s249 + $0x1a0] sm:$0xff]
        %v358 = vld [vmem:[%s249 + $0x1a8] sm:$0xff]
        %v359 = vld [vmem:[%s249 + $0x1b0] sm:$0xff]
        %v360 = vld [vmem:[%s249 + $0x1b8] sm:$0xff]
        %v361 = vld [vmem:[%s249 + $0x1c0] sm:$0xff]
        %v362 = vld [vmem:[%s249 + $0x1c8] sm:$0xff]
        %v363 = vld [vmem:[%s249 + $0x1d0] sm:$0xff]
        %v364 = vld [vmem:[%s249 + $0x1d8] sm:$0xff]
        %v365 = vld [vmem:[%s249 + $0x1e0] sm:$0xff]
        %v366 = vld [vmem:[%s249 + $0x1e8] sm:$0xff]
        %v367 = vld [vmem:[%s249 + $0x1f0] sm:$0xff]
        %v368 = vld [vmem:[%s249 + $0x1f8] sm:$0xff]
        %v369 = vld [vmem:[%s249 + $0x200] sm:$0xff]
        %v370 = vld [vmem:[%s249 + $0x208] sm:$0xff]
        %v371 = vld [vmem:[%s249 + $0x210] sm:$0xff]
        %v372 = vld [vmem:[%s249 + $0x218] sm:$0xff]
        %v373 = vld [vmem:[%s249 + $0x220] sm:$0xff]
        %v374 = vld [vmem:[%s249 + $0x228] sm:$0xff]
        %v375 = vld [vmem:[%s249 + $0x230] sm:$0xff]
        %v376 = vld [vmem:[%s249 + $0x238] sm:$0xff]
        %v377 = vld [vmem:[%s249 + $0x240] sm:$0xff]
        %v378 = vld [vmem:[%s249 + $0x248] sm:$0xff]
        %v379 = vld [vmem:[%s249 + $0x250] sm:$0xff]
        %v380 = vld [vmem:[%s249 + $0x258] sm:$0xff]
        %v381 = vld [vmem:[%s249 + $0x260] sm:$0xff]
        %v382 = vld [vmem:[%s249 + $0x268] sm:$0xff]
        %v383 = vld [vmem:[%s249 + $0x270] sm:$0xff]
        %v384 = vld [vmem:[%s249 + $0x278] sm:$0xff]
        %v385 = vld [vmem:[%s249 + $0x280] sm:$0xff]
        %v386 = vld [vmem:[%s249 + $0x288] sm:$0xff]
        %v387 = vld [vmem:[%s249 + $0x290] sm:$0xff]
        %v388 = vld [vmem:[%s249 + $0x298] sm:$0xff]
        %v389 = vld [vmem:[%s249 + $0x2a0] sm:$0xff]
        %v390 = vld [vmem:[%s249 + $0x2a8] sm:$0xff]
        %v391 = vld [vmem:[%s249 + $0x2b0] sm:$0xff]
        %v392 = vld [vmem:[%s249 + $0x2b8] sm:$0xff]
        %v393 = vld [vmem:[%s249 + $0x2c0] sm:$0xff]
        %v394 = vld [vmem:[%s249 + $0x2c8] sm:$0xff]
        %v395 = vld [vmem:[%s249 + $0x2d0] sm:$0xff]
        %v396 = vld [vmem:[%s249 + $0x2d8] sm:$0xff]
        %v397 = vld [vmem:[%s249 + $0x2e0] sm:$0xff]
        %v398 = vld [vmem:[%s249 + $0x2e8] sm:$0xff]
        %v399 = vld [vmem:[%s249 + $0x2f0] sm:$0xff]
        %v400 = vld [vmem:[%s249 + $0x2f8] sm:$0xff]
        %v401 = vld [vmem:[%s249 + $0x300] sm:$0xff]
        %v402 = vld [vmem:[%s249 + $0x308] sm:$0xff]
        %v403 = vld [vmem:[%s249 + $0x310] sm:$0xff]
        %v404 = vld [vmem:[%s249 + $0x318] sm:$0xff]
        %v405 = vld [vmem:[%s249 + $0x320] sm:$0xff]
        %v406 = vld [vmem:[%s249 + $0x328] sm:$0xff]
        %v407 = vld [vmem:[%s249 + $0x330] sm:$0xff]
        %v408 = vld [vmem:[%s249 + $0x338] sm:$0xff]
        %v409 = vld [vmem:[%s249 + $0x340] sm:$0xff]
        %v410 = vld [vmem:[%s249 + $0x348] sm:$0xff]
        %v411 = vld [vmem:[%s249 + $0x350] sm:$0xff]
        %v412 = vld [vmem:[%s249 + $0x358] sm:$0xff]
        %v413 = vld [vmem:[%s249 + $0x360] sm:$0xff]
        %v414 = vld [vmem:[%s249 + $0x368] sm:$0xff]
        %v415 = vld [vmem:[%s249 + $0x370] sm:$0xff]
        %v416 = vld [vmem:[%s249 + $0x378] sm:$0xff]
        %v417 = vld [vmem:[%s249 + $0x380] sm:$0xff]
        %v418 = vld [vmem:[%s249 + $0x388] sm:$0xff]
        %v419 = vld [vmem:[%s249 + $0x390] sm:$0xff]
        %v420 = vld [vmem:[%s249 + $0x398] sm:$0xff]
        %v421 = vld [vmem:[%s249 + $0x3a0] sm:$0xff]
        %v422 = vld [vmem:[%s249 + $0x3a8] sm:$0xff]
        %v423 = vld [vmem:[%s249 + $0x3b0] sm:$0xff]
        %v424 = vld [vmem:[%s249 + $0x3b8] sm:$0xff]
        %v425 = vld [vmem:[%s249 + $0x3c0] sm:$0xff]
        %v426 = vld [vmem:[%s249 + $0x3c8] sm:$0xff]
        %v427 = vld [vmem:[%s249 + $0x3d0] sm:$0xff]
        %v428 = vld [vmem:[%s249 + $0x3d8] sm:$0xff]
        %v429 = vld [vmem:[%s249 + $0x3e0] sm:$0xff]
        %v430 = vld [vmem:[%s249 + $0x3e8] sm:$0xff]
        %v431 = vld [vmem:[%s249 + $0x3f0] sm:$0xff]
        %v432 = vld [vmem:[%s249 + $0x3f8] sm:$0xff]
        %433 = vmatprep.subr.mxu0 0.0
        %434 = vmatpush1.msra.mxu0 %v305
        %435 = vmatprep.subr.mxu0 0.0
        %436 = vmatpush1.msra.mxu0 %v306
        %437 = vmatprep.subr.mxu0 0.0
        %438 = vmatpush1.msra.mxu0 %v307
        %439 = vmatprep.subr.mxu0 0.0
        %440 = vmatpush1.msra.mxu0 %v308
        %441 = vmatprep.subr.mxu0 0.0
        %442 = vmatpush1.msra.mxu0 %v309
        %443 = vmatprep.subr.mxu0 0.0
        %444 = vmatpush1.msra.mxu0 %v310
        %445 = vmatprep.subr.mxu0 0.0
        %446 = vmatpush1.msra.mxu0 %v311
        %447 = vmatprep.subr.mxu0 0.0
        %448 = vmatpush1.msra.mxu0 %v312
        %449 = vmatprep.subr.mxu0 0.0
        %450 = vmatpush1.msra.mxu0 %v313
        %451 = vmatprep.subr.mxu0 0.0
        %452 = vmatpush1.msra.mxu0 %v314
        %453 = vmatprep.subr.mxu0 0.0
        %454 = vmatpush1.msra.mxu0 %v315
        %455 = vmatprep.subr.mxu0 0.0
        %456 = vmatpush1.msra.mxu0 %v316
        %457 = vmatprep.subr.mxu0 0.0
        %458 = vmatpush1.msra.mxu0 %v317
        %459 = vmatprep.subr.mxu0 0.0
        %460 = vmatpush1.msra.mxu0 %v318
        %461 = vmatprep.subr.mxu0 0.0
        %462 = vmatpush1.msra.mxu0 %v319
        %463 = vmatprep.subr.mxu0 0.0
        %464 = vmatpush1.msra.mxu0 %v320
        %465 = vmatprep.subr.mxu0 0.0
        %466 = vmatpush1.msra.mxu0 %v321
        %467 = vmatprep.subr.mxu0 0.0
        %468 = vmatpush1.msra.mxu0 %v322
        %469 = vmatprep.subr.mxu0 0.0
        %470 = vmatpush1.msra.mxu0 %v323
        %471 = vmatprep.subr.mxu0 0.0
        %472 = vmatpush1.msra.mxu0 %v324
        %473 = vmatprep.subr.mxu0 0.0
        %474 = vmatpush1.msra.mxu0 %v325
        %475 = vmatprep.subr.mxu0 0.0
        %476 = vmatpush1.msra.mxu0 %v326
        %477 = vmatprep.subr.mxu0 0.0
        %478 = vmatpush1.msra.mxu0 %v327
        %479 = vmatprep.subr.mxu0 0.0
        %480 = vmatpush1.msra.mxu0 %v328
        %481 = vmatprep.subr.mxu0 0.0
        %482 = vmatpush1.msra.mxu0 %v329
        %483 = vmatprep.subr.mxu0 0.0
        %484 = vmatpush1.msra.mxu0 %v330
        %485 = vmatprep.subr.mxu0 0.0
        %486 = vmatpush1.msra.mxu0 %v331
        %487 = vmatprep.subr.mxu0 0.0
        %488 = vmatpush1.msra.mxu0 %v332
        %489 = vmatprep.subr.mxu0 0.0
        %490 = vmatpush1.msra.mxu0 %v333
        %491 = vmatprep.subr.mxu0 0.0
        %492 = vmatpush1.msra.mxu0 %v334
        %493 = vmatprep.subr.mxu0 0.0
        %494 = vmatpush1.msra.mxu0 %v335
        %495 = vmatprep.subr.mxu0 0.0
        %496 = vmatpush1.msra.mxu0 %v336
        %497 = vmatprep.mubr.f32.mxu0 %v290
        %498 = vmatmul.mubr.f32.gmra.mrb[0].mxu0 %v289
        %v499 = vpop.f32.mrb[0].mxu0
        %v500 = vadd.f32 0.0, %v499
        %v501 = vpop.f32.mrb[0].mxu0
        %502 = vmatprep.mubr.f32.mxu0 %v298
        %503 = vmatmul.mubr.f32.gmra.mrb[0].mxu0 %v297
        %v504 = vpop.f32.mrb[0].mxu0
        %v505 = vadd.f32 0.0, %v504
        %v506 = vpop.f32.mrb[0].mxu0
        %507 = vdwg.mxu0
        %508 = vmatprep.subr.mxu0 0.0
        %509 = vmatpush1.msra.mxu0 %v337
        %510 = vmatprep.subr.mxu0 0.0
        %511 = vmatpush1.msra.mxu0 %v338
        %512 = vmatprep.subr.mxu0 0.0
        %513 = vmatpush1.msra.mxu0 %v339
        %514 = vmatprep.subr.mxu0 0.0
        %515 = vmatpush1.msra.mxu0 %v340
        %516 = vmatprep.subr.mxu0 0.0
        %517 = vmatpush1.msra.mxu0 %v341
        %518 = vmatprep.subr.mxu0 0.0
        %519 = vmatpush1.msra.mxu0 %v342
        %520 = vmatprep.subr.mxu0 0.0
        %521 = vmatpush1.msra.mxu0 %v343
        %522 = vmatprep.subr.mxu0 0.0
        %523 = vmatpush1.msra.mxu0 %v344
        %524 = vmatprep.subr.mxu0 0.0
        %525 = vmatpush1.msra.mxu0 %v345
        %526 = vmatprep.subr.mxu0 0.0
        %527 = vmatpush1.msra.mxu0 %v346
        %528 = vmatprep.subr.mxu0 0.0
        %529 = vmatpush1.msra.mxu0 %v347
        %530 = vmatprep.subr.mxu0 0.0
        %531 = vmatpush1.msra.mxu0 %v348
        %532 = vmatprep.subr.mxu0 0.0
        %533 = vmatpush1.msra.mxu0 %v349
        %534 = vmatprep.subr.mxu0 0.0
        %535 = vmatpush1.msra.mxu0 %v350
        %536 = vmatprep.subr.mxu0 0.0
        %537 = vmatpush1.msra.mxu0 %v351
        %538 = vmatprep.subr.mxu0 0.0
        %539 = vmatpush1.msra.mxu0 %v352
        %540 = vmatprep.subr.mxu0 0.0
        %541 = vmatpush1.msra.mxu0 %v353
        %542 = vmatprep.subr.mxu0 0.0
        %543 = vmatpush1.msra.mxu0 %v354
        %544 = vmatprep.subr.mxu0 0.0
        %545 = vmatpush1.msra.mxu0 %v355
        %546 = vmatprep.subr.mxu0 0.0
        %547 = vmatpush1.msra.mxu0 %v356
        %548 = vmatprep.subr.mxu0 0.0
        %549 = vmatpush1.msra.mxu0 %v357
        %550 = vmatprep.subr.mxu0 0.0
        %551 = vmatpush1.msra.mxu0 %v358
        %552 = vmatprep.subr.mxu0 0.0
        %553 = vmatpush1.msra.mxu0 %v359
        %554 = vmatprep.subr.mxu0 0.0
        %555 = vmatpush1.msra.mxu0 %v360
        %556 = vmatprep.subr.mxu0 0.0
        %557 = vmatpush1.msra.mxu0 %v361
        %558 = vmatprep.subr.mxu0 0.0
        %559 = vmatpush1.msra.mxu0 %v362
        %560 = vmatprep.subr.mxu0 0.0
        %561 = vmatpush1.msra.mxu0 %v363
        %562 = vmatprep.subr.mxu0 0.0
        %563 = vmatpush1.msra.mxu0 %v364
        %564 = vmatprep.subr.mxu0 0.0
        %565 = vmatpush1.msra.mxu0 %v365
        %566 = vmatprep.subr.mxu0 0.0
        %567 = vmatpush1.msra.mxu0 %v366
        %568 = vmatprep.subr.mxu0 0.0
        %569 = vmatpush1.msra.mxu0 %v367
        %570 = vmatprep.subr.mxu0 0.0
        %571 = vmatpush1.msra.mxu0 %v368
        %572 = vmatprep.mubr.f32.mxu0 %v292
        %573 = vmatmul.mubr.f32.gmra.mrb[0].mxu0 %v291
        %v574 = vpop.f32.mrb[0].mxu0
        %v575 = vadd.f32 %v500, %v574
        %v576 = vpop.f32.mrb[0].mxu0
        %577 = vmatprep.mubr.f32.mxu0 %v300
        %578 = vmatmul.mubr.f32.gmra.mrb[0].mxu0 %v299
        %v579 = vpop.f32.mrb[0].mxu0
        %v580 = vadd.f32 %v505, %v579
        %v581 = vpop.f32.mrb[0].mxu0
        %582 = vdwg.mxu0
        %583 = vmatprep.subr.mxu0 0.0
        %584 = vmatpush1.msra.mxu0 %v369
        %585 = vmatprep.subr.mxu0 0.0
        %586 = vmatpush1.msra.mxu0 %v370
        %587 = vmatprep.subr.mxu0 0.0
        %588 = vmatpush1.msra.mxu0 %v371
        %589 = vmatprep.subr.mxu0 0.0
        %590 = vmatpush1.msra.mxu0 %v372
        %591 = vmatprep.subr.mxu0 0.0
        %592 = vmatpush1.msra.mxu0 %v373
        %593 = vmatprep.subr.mxu0 0.0
        %594 = vmatpush1.msra.mxu0 %v374
        %595 = vmatprep.subr.mxu0 0.0
        %596 = vmatpush1.msra.mxu0 %v375
        %597 = vmatprep.subr.mxu0 0.0
        %598 = vmatpush1.msra.mxu0 %v376
        %599 = vmatprep.subr.mxu0 0.0
        %600 = vmatpush1.msra.mxu0 %v377
        %601 = vmatprep.subr.mxu0 0.0
        %602 = vmatpush1.msra.mxu0 %v378
        %603 = vmatprep.subr.mxu0 0.0
        %604 = vmatpush1.msra.mxu0 %v379
        %605 = vmatprep.subr.mxu0 0.0
        %606 = vmatpush1.msra.mxu0 %v380
        %607 = vmatprep.subr.mxu0 0.0
        %608 = vmatpush1.msra.mxu0 %v381
        %609 = vmatprep.subr.mxu0 0.0
        %610 = vmatpush1.msra.mxu0 %v382
        %611 = vmatprep.subr.mxu0 0.0
        %612 = vmatpush1.msra.mxu0 %v383
        %613 = vmatprep.subr.mxu0 0.0
        %614 = vmatpush1.msra.mxu0 %v384
        %615 = vmatprep.subr.mxu0 0.0
        %616 = vmatpush1.msra.mxu0 %v385
        %617 = vmatprep.subr.mxu0 0.0
        %618 = vmatpush1.msra.mxu0 %v386
        %619 = vmatprep.subr.mxu0 0.0
        %620 = vmatpush1.msra.mxu0 %v387
        %621 = vmatprep.subr.mxu0 0.0
        %622 = vmatpush1.msra.mxu0 %v388
        %623 = vmatprep.subr.mxu0 0.0
        %624 = vmatpush1.msra.mxu0 %v389
        %625 = vmatprep.subr.mxu0 0.0
        %626 = vmatpush1.msra.mxu0 %v390
        %627 = vmatprep.subr.mxu0 0.0
        %628 = vmatpush1.msra.mxu0 %v391
        %629 = vmatprep.subr.mxu0 0.0
        %630 = vmatpush1.msra.mxu0 %v392
        %631 = vmatprep.subr.mxu0 0.0
        %632 = vmatpush1.msra.mxu0 %v393
        %633 = vmatprep.subr.mxu0 0.0
        %634 = vmatpush1.msra.mxu0 %v394
        %635 = vmatprep.subr.mxu0 0.0
        %636 = vmatpush1.msra.mxu0 %v395
        %637 = vmatprep.subr.mxu0 0.0
        %638 = vmatpush1.msra.mxu0 %v396
        %639 = vmatprep.subr.mxu0 0.0
        %640 = vmatpush1.msra.mxu0 %v397
        %641 = vmatprep.subr.mxu0 0.0
        %642 = vmatpush1.msra.mxu0 %v398
        %643 = vmatprep.subr.mxu0 0.0
        %644 = vmatpush1.msra.mxu0 %v399
        %645 = vmatprep.subr.mxu0 0.0
        %646 = vmatpush1.msra.mxu0 %v400
        %647 = vmatprep.mubr.f32.mxu0 %v294
        %648 = vmatmul.mubr.f32.gmra.mrb[0].mxu0 %v293
        %v649 = vpop.f32.mrb[0].mxu0
        %v650 = vadd.f32 %v575, %v649
        %v651 = vpop.f32.mrb[0].mxu0
        %652 = vmatprep.mubr.f32.mxu0 %v302
        %653 = vmatmul.mubr.f32.gmra.mrb[0].mxu0 %v301
        %v654 = vpop.f32.mrb[0].mxu0
        %v655 = vadd.f32 %v580, %v654
        %v656 = vpop.f32.mrb[0].mxu0
        %657 = vdwg.mxu0
        %658 = vmatprep.subr.mxu0 0.0
        %659 = vmatpush1.msra.mxu0 %v401
        %660 = vmatprep.subr.mxu0 0.0
        %661 = vmatpush1.msra.mxu0 %v402
        %662 = vmatprep.subr.mxu0 0.0
        %663 = vmatpush1.msra.mxu0 %v403
        %664 = vmatprep.subr.mxu0 0.0
        %665 = vmatpush1.msra.mxu0 %v404
        %666 = vmatprep.subr.mxu0 0.0
        %667 = vmatpush1.msra.mxu0 %v405
        %668 = vmatprep.subr.mxu0 0.0
        %669 = vmatpush1.msra.mxu0 %v406
        %670 = vmatprep.subr.mxu0 0.0
        %671 = vmatpush1.msra.mxu0 %v407
        %672 = vmatprep.subr.mxu0 0.0
        %673 = vmatpush1.msra.mxu0 %v408
        %674 = vmatprep.subr.mxu0 0.0
        %675 = vmatpush1.msra.mxu0 %v409
        %676 = vmatprep.subr.mxu0 0.0
        %677 = vmatpush1.msra.mxu0 %v410
        %678 = vmatprep.subr.mxu0 0.0
        %679 = vmatpush1.msra.mxu0 %v411
        %680 = vmatprep.subr.mxu0 0.0
        %681 = vmatpush1.msra.mxu0 %v412
        %682 = vmatprep.subr.mxu0 0.0
        %683 = vmatpush1.msra.mxu0 %v413
        %684 = vmatprep.subr.mxu0 0.0
        %685 = vmatpush1.msra.mxu0 %v414
        %686 = vmatprep.subr.mxu0 0.0
        %687 = vmatpush1.msra.mxu0 %v415
        %688 = vmatprep.subr.mxu0 0.0
        %689 = vmatpush1.msra.mxu0 %v416
        %690 = vmatprep.subr.mxu0 0.0
        %691 = vmatpush1.msra.mxu0 %v417
        %692 = vmatprep.subr.mxu0 0.0
        %693 = vmatpush1.msra.mxu0 %v418
        %694 = vmatprep.subr.mxu0 0.0
        %695 = vmatpush1.msra.mxu0 %v419
        %696 = vmatprep.subr.mxu0 0.0
        %697 = vmatpush1.msra.mxu0 %v420
        %698 = vmatprep.subr.mxu0 0.0
        %699 = vmatpush1.msra.mxu0 %v421
        %700 = vmatprep.subr.mxu0 0.0
        %701 = vmatpush1.msra.mxu0 %v422
        %702 = vmatprep.subr.mxu0 0.0
        %703 = vmatpush1.msra.mxu0 %v423
        %704 = vmatprep.subr.mxu0 0.0
        %705 = vmatpush1.msra.mxu0 %v424
        %706 = vmatprep.subr.mxu0 0.0
        %707 = vmatpush1.msra.mxu0 %v425
        %708 = vmatprep.subr.mxu0 0.0
        %709 = vmatpush1.msra.mxu0 %v426
        %710 = vmatprep.subr.mxu0 0.0
        %711 = vmatpush1.msra.mxu0 %v427
        %712 = vmatprep.subr.mxu0 0.0
        %713 = vmatpush1.msra.mxu0 %v428
        %714 = vmatprep.subr.mxu0 0.0
        %715 = vmatpush1.msra.mxu0 %v429
        %716 = vmatprep.subr.mxu0 0.0
        %717 = vmatpush1.msra.mxu0 %v430
        %718 = vmatprep.subr.mxu0 0.0
        %719 = vmatpush1.msra.mxu0 %v431
        %720 = vmatprep.subr.mxu0 0.0
        %721 = vmatpush1.msra.mxu0 %v432
        %722 = vmatprep.mubr.f32.mxu0 %v296
        %723 = vmatmul.mubr.f32.gmra.mrb[0].mxu0 %v295
        %v724 = vpop.f32.mrb[0].mxu0
        %v725 = vadd.f32 %v650, %v724
        %v726 = vpop.f32.mrb[0].mxu0
        %727 = vmatprep.mubr.f32.mxu0 %v304
        %728 = vmatmul.mubr.f32.gmra.mrb[0].mxu0 %v303
        %v729 = vpop.f32.mrb[0].mxu0
        %v730 = vadd.f32 %v655, %v729
        %v731 = vpop.f32.mrb[0].mxu0
        %732 = vdwg.mxu0
        %v733 = vadd.f32 %v287, %v725
        %v734 = vadd.f32 %v288, %v730
        %735 = vst [vmem:[#allocation8] sm:$0xff] %v733
        %736 = vst [vmem:[#allocation8 + $0x8] sm:$0xff] %v734
        %p737 = scmp.eq.s32.totalorder %s28, 1
        // Predicated region
        $region49: #{tpu_custom_call.1} parent=31 // pred_check
          %p738 = pneg %p737
        $region50: #{tpu_custom_call.1} parent=31 // pred_check_branch
          %740 = sbr.rel (%p738) target = $region52
        $region51: #{tpu_custom_call.1} parent=31 // pred_region
          %v741 = vld [vmem:[#allocation8] sm:$0xff]
          %v742 = vld [vmem:[#allocation8 + $0x8] sm:$0xff]
          %v743 = vld [vmem:[#allocation7] sm:$0xff]
          %v744 = vld [vmem:[#allocation7 + $0x8] sm:$0xff]
          %v745 = vadd.f32 %v741, %v743
          %v746 = vadd.f32 %v742, %v744
          %v747 = vmax.f32 %v745, 0.0
          %v748 = vmax.f32 %v746, 0.0
          %749 = vst [vmem:[#allocation8] sm:$0xff] %v747
          %750 = vst [vmem:[#allocation8 + $0x8] sm:$0xff] %v748
        $region52: #{tpu_custom_call.1} parent=31 // pred_fallthru
          _
        // Predicated region
        $region53: #{tpu_custom_call.1} parent=31 // pred_check
          %p751 = pneg %p144
        $region54: #{tpu_custom_call.1} parent=31 // pred_check_branch
          %753 = sbr.rel (%p751) target = $region56
        $region55: #{tpu_custom_call.1} parent=31 // pred_region
          %s754 = smul.u32 2, %s26
          %s756 = ssub.s32 256, 256
          %757 = vsyncadd [#allocation4], %s756
          %s758 = sadd.s32 %s27, %s754
          %s759 = smul.addr %s758, 128
          %s760 = scalar_lea.hbm %s3, %s759
          %s761 = sshll.u32 [#allocation8], 4
          %s762 = int_to_ptr.vmem [resolvable:$true] %s761
          %767 = dma.vmem_to_hbm [thread:$0]  %s762, 256, %s760, [#allocation4], 128, 128, 8
        $region56: #{tpu_custom_call.1} parent=31 // pred_fallthru
          _
        // Predicated region
        $region57: #{tpu_custom_call.1} parent=31 // pred_check
          %p768 = pneg %p144
        $region58: #{tpu_custom_call.1} parent=31 // pred_check_branch
          %770 = sbr.rel (%p768) target = $region60
        $region59: #{tpu_custom_call.1} parent=31 // pred_region
          %771 = dma.done [#allocation4], 256
        $region60: #{tpu_custom_call.1} parent=31 // pred_fallthru
          _
      $region32: #{tpu_custom_call.1} parent=5 // pred_fallthru
        _
      %p772 = scmp.le.s32.totalorder 2, %s16
      // Predicated region
      $region61: #{tpu_custom_call.1} parent=5 // pred_check
        %p773 = pneg %p772
      $region62: #{tpu_custom_call.1} parent=5 // pred_check_branch
        %775 = sbr.rel (%p773) target = $region64
      $region63: #{tpu_custom_call.1} parent=5 // pred_region
        %s776 = ssub.s32 %s16, 2
      $region64: #{tpu_custom_call.1} parent=5 // pred_fallthru
        _
    $region6: #{tpu_custom_call.1} parent=1 // loop_footer
      %s20 = sadd.s32 1, %s16
    $region7: #{tpu_custom_call.1} parent=1 // loop_footer_branch
      %15 = sbr.rel target = $region3
    $region8: #{tpu_custom_call.1} parent=1 // loop_exit
      _
    %777 = vsyncpa [#allocation3], 1
    %s778 = scalar_lea.sflag [#allocation3], 1
    %779 = vsyncpa %s778, 1
    %780 = vsyncpa [#allocation6], 1
    %s781 = scalar_lea.sflag [#allocation6], 1
    %782 = vsyncpa %s781, 1
    %783 = vsyncpa [#allocation4], 1
    %s784 = scalar_lea.sflag [#allocation4], 1
    %785 = vsyncpa %s784, 1

</llo_original>
